<compile_context>
chip_gen: v5e
topology: v5e:2x2
jax: 0.10.0
libtpu: 0.0.40
codegen_flags: <defaults>
</compile_context>

<pallas_src>
import functools

import jax
import jax.numpy as jnp
from jax.experimental import pallas as pl
from jax.experimental.pallas import tpu as pltpu

_LANE = 128        # lane width (last dim)
_SUBLANE = 16      # row-tile multiple: covers f32 (8) and bf16 (16) packing


def _round_up(x, n):
    return (x + n - 1) // n * n


def _pad2(a, rows, cols):
    pr, pc = rows - a.shape[0], cols - a.shape[1]
    if pr == 0 and pc == 0:
        return a
    return jnp.pad(a, ((0, pr), (0, pc)))


# ---------------------------------------------------------------------------
# One-time hardware / feature detection (cached; never wraps the real call).
# ---------------------------------------------------------------------------
@functools.lru_cache(maxsize=None)
def _vmem_capacity_bytes():
    try:
        info = pltpu.get_tpu_info()
        cap = int(getattr(info, "vmem_capacity_bytes", 0) or 0)
        if cap > 0:
            return cap
    except Exception:
        pass
    try:
        kind = jax.devices()[0].device_kind.lower()
    except Exception:
        kind = ""
    return (64 << 20) if "v7" in kind else (128 << 20)


@functools.lru_cache(maxsize=None)
def _num_tensorcores():
    try:
        dev = jax.devices()[0]
        ncores = getattr(dev, "num_cores", None)
        if ncores:
            return int(ncores)
        kind = dev.device_kind.lower()
    except Exception:
        return 1
    return 2 if any(t in kind for t in ("v4", "v5p", "v7")) else 1


@functools.lru_cache(maxsize=None)
def _single_buffer_supported():
    """One-time probe: can grid-invariant operands use pl.Buffered(1)?"""
    if not hasattr(pl, "Buffered"):
        return False
    try:
        def k(c_ref, x_ref, o_ref):
            o_ref[...] = x_ref[...] + c_ref[...]

        f = pl.pallas_call(
            k,
            out_shape=jax.ShapeDtypeStruct((8, _LANE), jnp.float32),
            grid_spec=pltpu.PrefetchScalarGridSpec(
                num_scalar_prefetch=0,
                grid=(1,),
                in_specs=[
                    pl.BlockSpec((8, _LANE), lambda i: (0, 0),
                                 pipeline_mode=pl.Buffered(1)),
                    pl.BlockSpec((8, _LANE), lambda i: (i, 0)),
                ],
                out_specs=pl.BlockSpec((8, _LANE), lambda i: (i, 0)),
            ),
        )
        out = jax.block_until_ready(
            f(jnp.ones((8, _LANE), jnp.float32), jnp.zeros((8, _LANE), jnp.float32)))
        return bool(jnp.allclose(out, 1.0))
    except Exception:
        return False


# ---------------------------------------------------------------------------
# Kernels
# ---------------------------------------------------------------------------
def _ln_epilogue(h, gamma, beta, *, eps, valid_cols):
    # Single-pass LayerNorm over the *unpadded* feature width. Padded columns
    # of `h` are exactly zero (zero weight cols / bias / residual), so plain
    # full-width sums are already correct -- no column mask needed.
    inv_n = 1.0 / valid_cols
    mean = jnp.sum(h, axis=-1, keepdims=True) * inv_n
    mean_sq = jnp.sum(h * h, axis=-1, keepdims=True) * inv_n
    var = jnp.maximum(mean_sq - mean * mean, 0.0)
    inv = jax.lax.rsqrt(var + eps)                    # EUP slot, off the VALU path
    out = (h - mean) * inv * gamma.astype(jnp.float32)
    return out + beta.astype(jnp.float32)


def _residual_kernel(x_ref, res_ref, w_ref, b_ref, gamma_ref, beta_ref, o_ref,
                     *, eps, valid_cols):
    x = x_ref[...]
    if x.dtype != w_ref.dtype:
        x = x.astype(w_ref.dtype)          # bf16 x bf16 feeds the MXU natively
    h = jnp.dot(x, w_ref[...], preferred_element_type=jnp.float32)
    # TODO(synk): dropout is identity (inference semantics); training-mode
    # dropout would use pltpu.prng_seed / pltpu.prng_random_bits.
    h = h + b_ref[...].astype(jnp.float32) + res_ref[...].astype(jnp.float32)
    o_ref[...] = _ln_epilogue(h, gamma_ref[...], beta_ref[...],
                              eps=eps, valid_cols=valid_cols).astype(o_ref.dtype)


def _residual_ksplit_kernel(x_ref, res_ref, w_ref, b_ref, gamma_ref, beta_ref,
                            o_ref, acc_ref, *, eps, valid_cols):
    k = pl.program_id(1)

    @pl.when(k == 0)
    def _():
        acc_ref[...] = jnp.zeros_like(acc_ref)

    x = x_ref[...]
    if x.dtype != w_ref.dtype:
        x = x.astype(w_ref.dtype)
    acc_ref[...] += jnp.dot(x, w_ref[...], preferred_element_type=jnp.float32)

    @pl.when(k == pl.num_programs(1) - 1)
    def _():
        h = (acc_ref[...] + b_ref[...].astype(jnp.float32)
             + res_ref[...].astype(jnp.float32))
        o_ref[...] = _ln_epilogue(h, gamma_ref[...], beta_ref[...],
                                  eps=eps, valid_cols=valid_cols).astype(o_ref.dtype)


# ---------------------------------------------------------------------------
# Params
# ---------------------------------------------------------------------------
def prepare_params(params, *, param_dtype=None):
    """One-time transform of PyTorch-convention params into kernel layout.

    Transposes the dense weight to (H_in, H_out), optionally casts it to bf16
    (MXU-native), and zero-pads feature axes to lane multiples. Call once.
    """
    w = params["dense_w"]                  # (H_out, H_in), PyTorch convention
    h_out, h_in = w.shape
    h_in_p = _round_up(h_in, _LANE)
    h_out_p = _round_up(h_out, _LANE)
    # TODO(synk): on v6e/v7x (2x 256x256 MXU) padding awkward hidden sizes to
    # 256 instead of 128 can squeeze a bit more out of the array.

    wt = jnp.transpose(w)                  # (H_in, H_out) -- done once
    if param_dtype is not None:
        wt = wt.astype(param_dtype)
    wt = _pad2(wt, h_in_p, h_out_p)

    def _vec(v):
        return _pad2(v.reshape(1, h_out).astype(jnp.float32), 1, h_out_p)

    return {"wt": wt, "b": _vec(params["dense_b"]), "gamma": _vec(params["ln_w"]),
            "beta": _vec(params["ln_b"]), "h_in": h_in, "h_out": h_out}


# ---------------------------------------------------------------------------
# Config selection + cached builder
# ---------------------------------------------------------------------------
def _choose_k_tiles(h_in_p, h_out_p, w_itemsize, budget, single_buffer,
                    force_k_tiles):
    if force_k_tiles is not None and int(force_k_tiles) > 1:
        nk = int(force_k_tiles)
        if h_in_p % nk == 0 and (h_in_p // nk) % _LANE == 0:
            return h_in_p // nk, nk
    wbuf = 1 if single_buffer else 2
    if wbuf * h_in_p * h_out_p * w_itemsize <= budget // 2:
        return h_in_p, 1                       # weight stays resident in VMEM
    # K-split: weight K-slabs stream, so they are double-buffered.
    for nk in range(2, h_in_p // _LANE + 1):
        if h_in_p % nk:
            continue
        tk = h_in_p // nk
        if tk % _LANE:
            continue
        if 2 * tk * h_out_p * w_itemsize <= budget // 2:
            return tk, nk
    return _LANE, h_in_p // _LANE              # best effort: smallest K slab


@functools.lru_cache(maxsize=None)
def _build_call(m, h_in, h_out, h_in_p, h_out_p, tm, tk, nk,
                x_dtype, r_dtype, w_dtype, out_dtype, eps,
                single_buffer, vmem_limit):
    x_dt, r_dt = jnp.dtype(x_dtype), jnp.dtype(r_dtype)
    w_dt, o_dt = jnp.dtype(w_dtype), jnp.dtype(out_dtype)
    grid_m = pl.cdiv(m, tm)

    const_kw = {"pipeline_mode": pl.Buffered(1)} if single_buffer else {}

    cost = pl.CostEstimate(
        flops=2 * m * h_in_p * h_out_p + 10 * m * h_out_p,
        transcendentals=m,
        bytes_accessed=int(m * h_in_p * x_dt.itemsize
                           + m * h_out_p * r_dt.itemsize
                           + h_in_p * h_out_p * w_dt.itemsize
                           + 3 * h_out_p * 4
                           + m * h_out_p * o_dt.itemsize),
    )

    if nk == 1:
        kernel = functools.partial(_residual_kernel, eps=eps, valid_cols=h_out)
        in_specs = [
            pl.BlockSpec((tm, h_in_p), lambda i: (i, 0)),                # x tile
            pl.BlockSpec((tm, h_out_p), lambda i: (i, 0)),               # residual
            pl.BlockSpec((h_in_p, h_out_p), lambda i: (0, 0), **const_kw),  # weight
            pl.BlockSpec((1, h_out_p), lambda i: (0, 0), **const_kw),    # bias
            pl.BlockSpec((1, h_out_p), lambda i: (0, 0), **const_kw),    # gamma
            pl.BlockSpec((1, h_out_p), lambda i: (0, 0), **const_kw),    # beta
        ]
        out_specs = pl.BlockSpec((tm, h_out_p), lambda i: (i, 0))
        grid = (grid_m,)
        scratch_shapes = ()
        dim_sem = ("parallel",)
    else:
        kernel = functools.partial(_residual_ksplit_kernel, eps=eps, valid_cols=h_out)
        in_specs = [
            pl.BlockSpec((tm, tk), lambda i, k: (i, k)),                 # x K-slab
            pl.BlockSpec((tm, h_out_p), lambda i, k: (i, 0)),            # residual
            pl.BlockSpec((tk, h_out_p), lambda i, k: (k, 0)),            # weight slab
            pl.BlockSpec((1, h_out_p), lambda i, k: (0, 0), **const_kw),
            pl.BlockSpec((1, h_out_p), lambda i, k: (0, 0), **const_kw),
            pl.BlockSpec((1, h_out_p), lambda i, k: (0, 0), **const_kw),
        ]
        out_specs = pl.BlockSpec((tm, h_out_p), lambda i, k: (i, 0))
        grid = (grid_m, nk)
        scratch_shapes = (pltpu.VMEM((tm, h_out_p), jnp.float32),)
        dim_sem = ("parallel", "arbitrary")

    call = pl.pallas_call(
        kernel,
        out_shape=jax.ShapeDtypeStruct((m, h_out_p), o_dt),
        grid_spec=pltpu.PrefetchScalarGridSpec(
            num_scalar_prefetch=0,
            grid=grid,
            in_specs=in_specs,
            out_specs=out_specs,
            scratch_shapes=scratch_shapes,
        ),
        compiler_params=pltpu.CompilerParams(
            dimension_semantics=dim_sem,
            vmem_limit_bytes=int(vmem_limit),
        ),
        cost_estimate=cost,
    )

    def fn(x2, r2, wt, b2, g2, be2):
        # Feature-axis padding only (zero columns hit zero weight rows). The
        # row axis uses a cdiv grid with masked partial-tile stores, so there
        # is no wrapper-side M padding / row slice (saves HBM activation copies).
        if h_in_p != h_in:
            x2 = jnp.pad(x2, ((0, 0), (0, h_in_p - h_in)))
        if h_out_p != h_out:
            r2 = jnp.pad(r2, ((0, 0), (0, h_out_p - h_out)))
        out2 = call(x2, r2, wt, b2, g2, be2)
        if h_out_p != h_out:
            out2 = out2[:, :h_out]
        return out2

    return jax.jit(fn)


def residual_forward(hidden_states, input_tensor, prepared, *, eps=1e-12,
                     tm=None, force_k_tiles=None):
    """hidden_states: (..., H_in), input_tensor: (..., H_out)."""
    h_in, h_out = prepared["h_in"], prepared["h_out"]
    wt, b2, g2, be2 = prepared["wt"], prepared["b"], prepared["gamma"], prepared["beta"]
    h_in_p, h_out_p = wt.shape
    out_dtype = jnp.dtype(hidden_states.dtype)

    x2 = hidden_states.reshape(-1, h_in)
    r2 = input_tensor.reshape(-1, h_out)
    m = x2.shape[0]

    cap = _vmem_capacity_bytes()
    budget = cap * 3 // 4                       # v7x ~48 MiB; v5e/v6e ~96 MiB
    single_buffer = _single_buffer_supported()

    x_sz = jnp.dtype(x2.dtype).itemsize
    r_sz = jnp.dtype(r2.dtype).itemsize
    w_sz = jnp.dtype(wt.dtype).itemsize
    o_sz = out_dtype.itemsize

    tk, nk = _choose_k_tiles(h_in_p, h_out_p, w_sz, budget, single_buffer,
                             force_k_tiles)
    wbuf = 1 if (single_buffer and nk == 1) else 2

    def vmem_bytes(tmx):
        acts = 2 * tmx * (tk * x_sz + h_out_p * r_sz + h_out_p * o_sz)
        weight = wbuf * tk * h_out_p * w_sz
        vecs = 2 * 3 * h_out_p * 4
        # in-kernel f32 intermediates (h, h*h epilogue, out) + acc scratch.
        interm = (3 + (1 if nk > 1 else 0)) * tmx * h_out_p * 4
        return acts + weight + vecs + interm

    if tm is None:
        tm = 512 if cap >= (96 << 20) else 256  # bigger tiles on 128 MiB parts
    tm_eff = max(_SUBLANE, min(_round_up(tm, _SUBLANE), _round_up(m, _SUBLANE)))
    floor = min(128 if m >= 128 else _SUBLANE, tm_eff)
    while tm_eff > floor and vmem_bytes(tm_eff) > budget:
        tm_eff = max(floor, _round_up(tm_eff // 2, _SUBLANE))
    if _num_tensorcores() >= 2:
        # Only multi-TensorCore parts benefit from forcing >= 2 row blocks.
        while pl.cdiv(m, tm_eff) < 2 and tm_eff > floor:
            tm_eff = max(floor, _round_up(tm_eff // 2, _SUBLANE))

    vmem_limit = int(min(max(vmem_bytes(tm_eff) + (8 << 20), 32 << 20),
                         cap - (4 << 20)))

    fn = _build_call(m, h_in, h_out, h_in_p, h_out_p, tm_eff, tk, nk,
                     jnp.dtype(x2.dtype).name, jnp.dtype(r2.dtype).name,
                     jnp.dtype(wt.dtype).name, out_dtype.name, float(eps),
                     bool(single_buffer), vmem_limit)
    out2 = fn(x2, r2, wt, b2, g2, be2)
    return out2.reshape(*input_tensor.shape[:-1], h_out)


# ---------------------------------------------------------------------------
# Init + reference + self-test
# ---------------------------------------------------------------------------
def init_params(key, input_size, output_size, dtype=jnp.float32):
    k_w, k_b = jax.random.split(key)
    bound = 1.0 / (input_size ** 0.5)
    dense_w = jax.random.uniform(k_w, (output_size, input_size), dtype, -bound, bound)
    dense_b = jax.random.uniform(k_b, (output_size,), dtype, -bound, bound)
    ln_w = jnp.ones((output_size,), dtype)
    ln_b = jnp.zeros((output_size,), dtype)
    return {"dense_w": dense_w, "dense_b": dense_b, "ln_w": ln_w, "ln_b": ln_b}


def _reference(hidden_states, input_tensor, params, eps):
    h = jnp.dot(hidden_states, params["dense_w"].T,
                precision=jax.lax.Precision.HIGHEST) + params["dense_b"]
    h = h + input_tensor
    mean = jnp.mean(h, axis=-1, keepdims=True)
    var = jnp.mean((h - mean) ** 2, axis=-1, keepdims=True)
    return (h - mean) / jnp.sqrt(var + eps) * params["ln_w"] + params["ln_b"]


if __name__ == "__main__":
    key = jax.random.PRNGKey(0)
    eps = 1e-12
    keys = jax.random.split(key, 9)

    cases = [
        # (batch, seq, in_size, out_size, param_dtype, force_k_tiles, tol)
        (2, 8, 32, 32, None, None, 1e-2),                # f32 path, lane padding
        (3, 96, 160, 192, jnp.bfloat16, None, 6e-2),     # bf16 MXU path, in!=out
        (2, 64, 256, 128, jnp.bfloat16, 2, 6e-2),        # bf16 + K-split path
    ]

    kidx = 0
    for (batch, seq, input_size, output_size, pdtype, k_tiles, tol) in cases:
        kp, kx, kr = keys[kidx], keys[kidx + 1], keys[kidx + 2]
        kidx += 3
        params = init_params(kp, input_size, output_size)
        prepared = prepare_params(params, param_dtype=pdtype)   # one-time
        hidden_states = jax.random.normal(kx, (batch, seq, input_size), jnp.float32)
        input_tensor = jax.random.normal(kr, (batch, seq, output_size), jnp.float32)

        out = residual_forward(hidden_states, input_tensor, prepared, eps=eps,
                               force_k_tiles=k_tiles)
        out = jax.block_until_ready(out)

        ref = _reference(hidden_states, input_tensor, params, eps)
        assert out.shape == (batch, seq, output_size)
        max_err = float(jnp.max(jnp.abs(out - ref)))
        assert jnp.allclose(out, ref, atol=tol, rtol=tol), (
            f"mismatch (max_err={max_err:.3e}) vs reference for case "
            f"{(batch, seq, input_size, output_size, pdtype)}")

    print("KERNEL_OK")
</pallas_src>

<mosaic_0001>
module attributes {stable_mosaic.version = 11 : i64} {
  func.func @k(%arg0: i32, %arg1: memref<8x128xf32, #tpu.memory_space<vmem>>, %arg2: memref<8x128xf32, #tpu.memory_space<vmem>>, %arg3: memref<8x128xf32, #tpu.memory_space<vmem>>) attributes {dimension_semantics = [#tpu.dimension_semantics<arbitrary>], iteration_bounds = array<i64: 1>, scalar_prefetch = 0 : i64, scratch_operands = 0 : i64, tpu.core_type = #tpu.core_type<tc>, window_params = [{pipeline_mode = #tpu.pipeline_mode<synchronous>, transform_indices = @transform_0, window_bounds = array<i64: 8, 128>}, {transform_indices = @transform_1, window_bounds = array<i64: 8, 128>}, {transform_indices = @transform_2, window_bounds = array<i64: 8, 128>}]} {
    %c0 = arith.constant 0 : index
    %c0_0 = arith.constant 0 : index
    %0 = vector.load %arg2[%c0, %c0_0] : memref<8x128xf32, #tpu.memory_space<vmem>>, vector<8x128xf32>
    %c0_1 = arith.constant 0 : index
    %c0_2 = arith.constant 0 : index
    %1 = vector.load %arg1[%c0_1, %c0_2] : memref<8x128xf32, #tpu.memory_space<vmem>>, vector<8x128xf32>
    %2 = arith.addf %0, %1 : vector<8x128xf32>
    %c0_3 = arith.constant 0 : index
    %c0_4 = arith.constant 0 : index
    %3 = vector.load %arg3[%c0_3, %c0_4] : memref<8x128xf32, #tpu.memory_space<vmem>>, vector<8x128xf32>
    tpu.vector_store %arg3[%c0_3, %c0_4], %2 {strides = array<i32>} : memref<8x128xf32, #tpu.memory_space<vmem>>, vector<8x128xf32>,
    return
  }
  func.func @transform_0(%arg0: i32) -> (i32, i32) {
    %c0_i32 = arith.constant 0 : i32
    %c0_i32_0 = arith.constant 0 : i32
    %c0_i32_1 = arith.constant 0 : i32
    return %c0_i32, %c0_i32_0 : i32, i32
  }
  func.func @transform_1(%arg0: i32) -> (i32, i32) {
    %c0_i32 = arith.constant 0 : i32
    %c0_i32_0 = arith.constant 0 : i32
    return %arg0, %c0_i32 : i32, i32
  }
  func.func @transform_2(%arg0: i32) -> (i32, i32) {
    %c0_i32 = arith.constant 0 : i32
    %c0_i32_0 = arith.constant 0 : i32
    return %arg0, %c0_i32 : i32, i32
  }
}

module attributes {stable_mosaic.version = 11 : i64} {
  func.func @_residual_kernel(%arg0: i32, %arg1: memref<16x128xf32, #tpu.memory_space<vmem>>, %arg2: memref<16x128xf32, #tpu.memory_space<vmem>>, %arg3: memref<128x128xf32, #tpu.memory_space<vmem>>, %arg4: memref<1x128xf32, #tpu.memory_space<vmem>>, %arg5: memref<1x128xf32, #tpu.memory_space<vmem>>, %arg6: memref<1x128xf32, #tpu.memory_space<vmem>>, %arg7: memref<16x128xf32, #tpu.memory_space<vmem>>) attributes {dimension_semantics = [#tpu.dimension_semantics<parallel>], iteration_bounds = array<i64: 1>, scalar_prefetch = 0 : i64, scratch_operands = 0 : i64, tpu.core_type = #tpu.core_type<tc>, window_params = [{transform_indices = @transform_0, window_bounds = array<i64: 16, 128>}, {transform_indices = @transform_1, window_bounds = array<i64: 16, 128>}, {pipeline_mode = #tpu.pipeline_mode<synchronous>, transform_indices = @transform_2, window_bounds = array<i64: 128, 128>}, {pipeline_mode = #tpu.pipeline_mode<synchronous>, transform_indices = @transform_3, window_bounds = array<i64: 1, 128>}, {pipeline_mode = #tpu.pipeline_mode<synchronous>, transform_indices = @transform_4, window_bounds = array<i64: 1, 128>}, {pipeline_mode = #tpu.pipeline_mode<synchronous>, transform_indices = @transform_5, window_bounds = array<i64: 1, 128>}, {transform_indices = @transform_6, window_bounds = array<i64: 16, 128>}]} {
    %c0 = arith.constant 0 : index
    %c0_0 = arith.constant 0 : index
    %0 = vector.load %arg1[%c0, %c0_0] : memref<16x128xf32, #tpu.memory_space<vmem>>, vector<16x128xf32>
    %c0_1 = arith.constant 0 : index
    %c0_2 = arith.constant 0 : index
    %1 = vector.load %arg3[%c0_1, %c0_2] : memref<128x128xf32, #tpu.memory_space<vmem>>, vector<128x128xf32>
    %cst = arith.constant dense<0.000000e+00> : vector<16x128xf32>
    %2 = tpu.matmul %0, %1, %cst {dimension_numbers = #tpu.dot_dimension_numbers<[1], [0], [0], [1], [0, 0, 1, 1], [], []>} : vector<16x128xf32>, vector<128x128xf32>, vector<16x128xf32> -> vector<16x128xf32>
    %c0_3 = arith.constant 0 : index
    %c0_4 = arith.constant 0 : index
    %3 = vector.load %arg4[%c0_3, %c0_4] : memref<1x128xf32, #tpu.memory_space<vmem>>, vector<1x128xf32>
    %4 = vector.broadcast %3 : vector<1x128xf32> to vector<16x128xf32>
    %5 = arith.addf %2, %4 : vector<16x128xf32>
    %c0_5 = arith.constant 0 : index
    %c0_6 = arith.constant 0 : index
    %6 = vector.load %arg2[%c0_5, %c0_6] : memref<16x128xf32, #tpu.memory_space<vmem>>, vector<16x128xf32>
    %7 = arith.addf %5, %6 : vector<16x128xf32>
    %c0_7 = arith.constant 0 : index
    %c0_8 = arith.constant 0 : index
    %8 = vector.load %arg5[%c0_7, %c0_8] : memref<1x128xf32, #tpu.memory_space<vmem>>, vector<1x128xf32>
    %c0_9 = arith.constant 0 : index
    %c0_10 = arith.constant 0 : index
    %9 = vector.load %arg6[%c0_9, %c0_10] : memref<1x128xf32, #tpu.memory_space<vmem>>, vector<1x128xf32>
    %cst_11 = arith.constant dense<0.000000e+00> : vector<16xf32>
    %10 = vector.multi_reduction <add>, %7, %cst_11 [1] : vector<16x128xf32> to vector<16xf32>
    %11 = vector.shape_cast %10 : vector<16xf32> to vector<16x1xf32>
    %cst_12 = arith.constant 3.125000e-02 : f32
    %12 = vector.broadcast %cst_12 : f32 to vector<16x1xf32>
    %13 = arith.mulf %11, %12 : vector<16x1xf32>
    %14 = arith.mulf %7, %7 : vector<16x128xf32>
    %cst_13 = arith.constant dense<0.000000e+00> : vector<16xf32>
    %15 = vector.multi_reduction <add>, %14, %cst_13 [1] : vector<16x128xf32> to vector<16xf32>
    %16 = vector.shape_cast %15 : vector<16xf32> to vector<16x1xf32>
    %cst_14 = arith.constant 3.125000e-02 : f32
    %17 = vector.broadcast %cst_14 : f32 to vector<16x1xf32>
    %18 = arith.mulf %16, %17 : vector<16x1xf32>
    %19 = arith.mulf %13, %13 : vector<16x1xf32>
    %20 = arith.subf %18, %19 : vector<16x1xf32>
    %cst_15 = arith.constant 0.000000e+00 : f32
    %21 = vector.broadcast %cst_15 : f32 to vector<16x1xf32>
    %22 = arith.maximumf %20, %21 : vector<16x1xf32>
    %cst_16 = arith.constant 9.99999996E-13 : f32
    %23 = vector.broadcast %cst_16 : f32 to vector<16x1xf32>
    %24 = arith.addf %22, %23 : vector<16x1xf32>
    %25 = math.rsqrt %24 : vector<16x1xf32>
    %26 = vector.broadcast %13 : vector<16x1xf32> to vector<16x128xf32>
    %27 = arith.subf %7, %26 : vector<16x128xf32>
    %28 = vector.broadcast %25 : vector<16x1xf32> to vector<16x128xf32>
    %29 = arith.mulf %27, %28 : vector<16x128xf32>
    %30 = vector.broadcast %8 : vector<1x128xf32> to vector<16x128xf32>
    %31 = arith.mulf %29, %30 : vector<16x128xf32>
    %32 = vector.broadcast %9 : vector<1x128xf32> to vector<16x128xf32>
    %33 = arith.addf %31, %32 : vector<16x128xf32>
    %c0_17 = arith.constant 0 : index
    %c0_18 = arith.constant 0 : index
    %34 = vector.load %arg7[%c0_17, %c0_18] : memref<16x128xf32, #tpu.memory_space<vmem>>, vector<16x128xf32>
    tpu.vector_store %arg7[%c0_17, %c0_18], %33 {strides = array<i32>} : memref<16x128xf32, #tpu.memory_space<vmem>>, vector<16x128xf32>,
    return
  }
  func.func @transform_0(%arg0: i32) -> (i32, i32) {
    %c0_i32 = arith.constant 0 : i32
    %c0_i32_0 = arith.constant 0 : i32
    return %arg0, %c0_i32 : i32, i32
  }
  func.func @transform_1(%arg0: i32) -> (i32, i32) {
    %c0_i32 = arith.constant 0 : i32
    %c0_i32_0 = arith.constant 0 : i32
    return %arg0, %c0_i32 : i32, i32
  }
  func.func @transform_2(%arg0: i32) -> (i32, i32) {
    %c0_i32 = arith.constant 0 : i32
    %c0_i32_0 = arith.constant 0 : i32
    %c0_i32_1 = arith.constant 0 : i32
    return %c0_i32, %c0_i32_0 : i32, i32
  }
  func.func @transform_3(%arg0: i32) -> (i32, i32) {
    %c0_i32 = arith.constant 0 : i32
    %c0_i32_0 = arith.constant 0 : i32
    %c0_i32_1 = arith.constant 0 : i32
    return %c0_i32, %c0_i32_0 : i32, i32
  }
  func.func @transform_4(%arg0: i32) -> (i32, i32) {
    %c0_i32 = arith.constant 0 : i32
    %c0_i32_0 = arith.constant 0 : i32
    %c0_i32_1 = arith.constant 0 : i32
    return %c0_i32, %c0_i32_0 : i32, i32
  }
  func.func @transform_5(%arg0: i32) -> (i32, i32) {
    %c0_i32 = arith.constant 0 : i32
    %c0_i32_0 = arith.constant 0 : i32
    %c0_i32_1 = arith.constant 0 : i32
    return %c0_i32, %c0_i32_0 : i32, i32
  }
  func.func @transform_6(%arg0: i32) -> (i32, i32) {
    %c0_i32 = arith.constant 0 : i32
    %c0_i32_0 = arith.constant 0 : i32
    return %arg0, %c0_i32 : i32, i32
  }
}

</mosaic_0001>

<llo_original>
// kernel: tpu_custom_call.1
$region0: #{tpu_custom_call.1}
  #allocation0 [shape = 'u32[]', space=smem, size = 0x4, offset = 0x4, fixed_abs, tag = 'smem constant byte address 0x4 - core index']
  #allocation1 [shape = 'u32[72,128]{1,0:T(1,128)}', space=vmem, size = 0x9000, scoped, tag = 'internal scratch']
  %s0 = inlined_call_operand.hbm [shape: f32[8,128], index: 0, kind: input, shape index: {}]
  %s1 = inlined_call_operand.hbm [shape: f32[8,128], index: 1, kind: input, shape index: {}]
  %s2 = inlined_call_operand.hbm [shape: f32[8,128], index: 2, kind: output, shape index: {}]
  %s3 = sld [smem:[#allocation0]]
  $region26: #{tpu_custom_call.1} parent=0
    _
  %s5 = ssub.s32 1, %s3
  %s6 = scalar_select 0, %s5, %s3
  $region1: #{tpu_custom_call.1} parent=0
    #allocation2 [shape = 'u8[4096]{0}', space=vmem, size = 0x1000, scoped, tag = 'input window, operand 0, single buffered']
    #allocation3 [shape = 's32[1]{0}', space=sflag, size = 0x4, scoped, tag = 'scoped memory for tpu_custom_call.1']
    #allocation4 [shape = 's32[1]{0}', space=sflag, size = 0x4, scoped, tag = 'scoped memory for tpu_custom_call.1']
    #allocation5 [shape = 'u8[4096]{0}', space=vmem, size = 0x1000, scoped, tag = 'input window, operand 1, single buffered']
    #allocation6 [shape = 's32[1]{0}', space=sflag, size = 0x4, scoped, tag = 'scoped memory for tpu_custom_call.1']
    #allocation7 [shape = 'u8[4096]{0}', space=vmem, size = 0x1000, scoped, tag = 'output window, operand 0, single buffered']
    %7 = vsyncpa [#allocation3], 0
    %8 = vsyncpa [#allocation6], 0
    %9 = vsyncpa [#allocation4], 0
    // Predicated region
    $region2: #{tpu_custom_call.1} parent=1 // pred_check
      _
    $region3: #{tpu_custom_call.1} parent=1 // pred_check_branch
      %11 = sbr.rel (0) target = $region5
    $region4: #{tpu_custom_call.1} parent=1 // pred_region
      %13 = vsyncadd [#allocation3], 0
      %s15 = sshll.u32 %s0, 4
      %s16 = int_to_ptr.hbm [resolvable:$true] %s15
      %s17 = sshll.u32 [#allocation2], 4
      %s18 = int_to_ptr.vmem [resolvable:$true] %s17
      %20 = dma.hbm_to_vmem [thread:$0]  %s16, 128, %s18, [#allocation3]
    $region5: #{tpu_custom_call.1} parent=1 // pred_fallthru
      _
    // Predicated region
    $region6: #{tpu_custom_call.1} parent=1 // pred_check
      _
    $region7: #{tpu_custom_call.1} parent=1 // pred_check_branch
      %22 = sbr.rel (0) target = $region9
    $region8: #{tpu_custom_call.1} parent=1 // pred_region
      %24 = vsyncadd [#allocation6], 0
      %s26 = sshll.u32 %s1, 4
      %s27 = int_to_ptr.hbm [resolvable:$true] %s26
      %s28 = sshll.u32 [#allocation5], 4
      %s29 = int_to_ptr.vmem [resolvable:$true] %s28
      %31 = dma.hbm_to_vmem [thread:$0]  %s27, 128, %s29, [#allocation6]
    $region9: #{tpu_custom_call.1} parent=1 // pred_fallthru
      _
    // Predicated region
    $region10: #{tpu_custom_call.1} parent=1 // pred_check
      _
    $region11: #{tpu_custom_call.1} parent=1 // pred_check_branch
      %33 = sbr.rel (0) target = $region13
    $region12: #{tpu_custom_call.1} parent=1 // pred_region
      %35 = dma.done [#allocation3], 128
    $region13: #{tpu_custom_call.1} parent=1 // pred_fallthru
      _
    // Predicated region
    $region14: #{tpu_custom_call.1} parent=1 // pred_check
      _
    $region15: #{tpu_custom_call.1} parent=1 // pred_check_branch
      %37 = sbr.rel (0) target = $region17
    $region16: #{tpu_custom_call.1} parent=1 // pred_region
      %39 = dma.done [#allocation6], 128
    $region17: #{tpu_custom_call.1} parent=1 // pred_fallthru
      _
    %v40 = vld [vmem:[#allocation5] sm:$0xff]
    %v41 = vld [vmem:[#allocation2] sm:$0xff]
    %v42 = vadd.f32 %v40, %v41
    %43 = vst [vmem:[#allocation7] sm:$0xff] %v42
    // Predicated region
    $region18: #{tpu_custom_call.1} parent=1 // pred_check
      _
    $region19: #{tpu_custom_call.1} parent=1 // pred_check_branch
      %45 = sbr.rel (0) target = $region21
    $region20: #{tpu_custom_call.1} parent=1 // pred_region
      %47 = vsyncadd [#allocation4], 0
      %s49 = sshll.u32 [#allocation7], 4
      %s50 = int_to_ptr.vmem [resolvable:$true] %s49
      %s51 = sshll.u32 %s2, 4
      %s52 = int_to_ptr.hbm [resolvable:$true] %s51
      %54 = dma.vmem_to_hbm [thread:$0]  %s50, 128, %s52, [#allocation4]
    $region21: #{tpu_custom_call.1} parent=1 // pred_fallthru
      _
    // Predicated region
    $region22: #{tpu_custom_call.1} parent=1 // pred_check
      _
    $region23: #{tpu_custom_call.1} parent=1 // pred_check_branch
      %56 = sbr.rel (0) target = $region25
    $region24: #{tpu_custom_call.1} parent=1 // pred_region
      %58 = dma.done [#allocation4], 128
    $region25: #{tpu_custom_call.1} parent=1 // pred_fallthru
      _
    %59 = vsyncpa [#allocation3], 1
    %60 = vsyncpa [#allocation6], 1
    %61 = vsyncpa [#allocation4], 1

// kernel: fn.1
$region0: #{fn.1}
  #allocation0 [shape = 'u32[]', space=smem, size = 0x4, offset = 0x4, fixed_abs, tag = 'smem constant byte address 0x4 - core index']
  #allocation1 [shape = 'u32[72,128]{1,0:T(1,128)}', space=vmem, size = 0x9000, scoped, tag = 'internal scratch']
  %s0 = inlined_call_operand.vmem [shape: f32[16,128], index: 0, kind: input, shape index: {}]
  %s1 = inlined_call_operand.vmem [shape: f32[16,128], index: 1, kind: input, shape index: {}]
  %s2 = inlined_call_operand.hbm [shape: f32[128,128], index: 2, kind: input, shape index: {}]
  %s3 = inlined_call_operand.vmem [shape: f32[1,128], index: 3, kind: input, shape index: {}]
  %s4 = inlined_call_operand.vmem [shape: f32[1,128], index: 4, kind: input, shape index: {}]
  %s5 = inlined_call_operand.vmem [shape: f32[1,128], index: 5, kind: input, shape index: {}]
  %s6 = inlined_call_operand.hbm [shape: f32[16,128], index: 6, kind: output, shape index: {}]
  %s7 = sld [smem:[#allocation0]]
  $region38: #{fn.1} parent=0
    _
  %s9 = ssub.s32 1, %s7
  %s10 = scalar_select 0, %s9, %s7
  $region1: #{fn.1} parent=0
    #allocation2 [shape = 'u8[65536]{0}', space=vmem, size = 0x10000, scoped, tag = 'input window, operand 2, single buffered']
    #allocation3 [shape = 's32[1]{0}', space=sflag, size = 0x4, scoped, tag = 'scoped memory for fn.1']
    #allocation4 [shape = 's32[1]{0}', space=sflag, size = 0x4, scoped, tag = 'scoped memory for fn.1']
    #allocation5 [shape = 'u8[8192]{0}', space=vmem, size = 0x2000, scoped, tag = 'output window, operand 0, single buffered']
    %11 = vsyncpa [#allocation3], 0
    %12 = vsyncpa [#allocation4], 0
    // Predicated region
    $region2: #{fn.1} parent=1 // pred_check
      _
    $region3: #{fn.1} parent=1 // pred_check_branch
      %14 = sbr.rel (0) target = $region5
    $region4: #{fn.1} parent=1 // pred_region
      _
    $region5: #{fn.1} parent=1 // pred_fallthru
      _
    // Predicated region
    $region6: #{fn.1} parent=1 // pred_check
      _
    $region7: #{fn.1} parent=1 // pred_check_branch
      %16 = sbr.rel (0) target = $region9
    $region8: #{fn.1} parent=1 // pred_region
      _
    $region9: #{fn.1} parent=1 // pred_fallthru
      _
    // Predicated region
    $region10: #{fn.1} parent=1 // pred_check
      _
    $region11: #{fn.1} parent=1 // pred_check_branch
      %18 = sbr.rel (0) target = $region13
    $region12: #{fn.1} parent=1 // pred_region
      %20 = vsyncadd [#allocation3], 0
      %s21 = sshll.u32 %s2, 4
      %s22 = int_to_ptr.hbm [resolvable:$true] %s21
      %s23 = sshll.u32 [#allocation2], 4
      %s24 = int_to_ptr.vmem [resolvable:$true] %s23
      %29 = dma.hbm_to_vmem [thread:$0]  %s22, 2048, %s24, [#allocation3], 128, 128, 8
    $region13: #{fn.1} parent=1 // pred_fallthru
      _
    // Predicated region
    $region14: #{fn.1} parent=1 // pred_check
      _
    $region15: #{fn.1} parent=1 // pred_check_branch
      %31 = sbr.rel (0) target = $region17
    $region16: #{fn.1} parent=1 // pred_region
      _
    $region17: #{fn.1} parent=1 // pred_fallthru
      _
    // Predicated region
    $region18: #{fn.1} parent=1 // pred_check
      _
    $region19: #{fn.1} parent=1 // pred_check_branch
      %33 = sbr.rel (0) target = $region21
    $region20: #{fn.1} parent=1 // pred_region
      _
    $region21: #{fn.1} parent=1 // pred_fallthru
      _
    // Predicated region
    $region22: #{fn.1} parent=1 // pred_check
      _
    $region23: #{fn.1} parent=1 // pred_check_branch
      %35 = sbr.rel (0) target = $region25
    $region24: #{fn.1} parent=1 // pred_region
      _
    $region25: #{fn.1} parent=1 // pred_fallthru
      _
    // Predicated region
    $region26: #{fn.1} parent=1 // pred_check
      _
    $region27: #{fn.1} parent=1 // pred_check_branch
      %37 = sbr.rel (0) target = $region29
    $region28: #{fn.1} parent=1 // pred_region
      %39 = dma.done [#allocation3], 2048
    $region29: #{fn.1} parent=1 // pred_fallthru
      _
    %v40 = vld [vmem:[%s0] sm:$0xff]
    %v41 = vld [vmem:[%s0 + $0x8] sm:$0xff]
    %v42 = vld [vmem:[#allocation2] sm:$0xff]
    %v43 = vld [vmem:[#allocation2 + $0x8] sm:$0xff]
    %v44 = vld [vmem:[#allocation2 + $0x10] sm:$0xff]
    %v45 = vld [vmem:[#allocation2 + $0x18] sm:$0xff]
    %v46 = vld [vmem:[#allocation2 + $0x20] sm:$0xff]
    %v47 = vld [vmem:[#allocation2 + $0x28] sm:$0xff]
    %v48 = vld [vmem:[#allocation2 + $0x30] sm:$0xff]
    %v49 = vld [vmem:[#allocation2 + $0x38] sm:$0xff]
    %v50 = vld [vmem:[#allocation2 + $0x40] sm:$0xff]
    %v51 = vld [vmem:[#allocation2 + $0x48] sm:$0xff]
    %v52 = vld [vmem:[#allocation2 + $0x50] sm:$0xff]
    %v53 = vld [vmem:[#allocation2 + $0x58] sm:$0xff]
    %v54 = vld [vmem:[#allocation2 + $0x60] sm:$0xff]
    %v55 = vld [vmem:[#allocation2 + $0x68] sm:$0xff]
    %v56 = vld [vmem:[#allocation2 + $0x70] sm:$0xff]
    %v57 = vld [vmem:[#allocation2 + $0x78] sm:$0xff]
    %v58 = vld [vmem:[%s3] sm:$0x1]
    %v60 = vperm.slane %v58, 0
    %62 = vmatpush.msra.mxu0 %v57
    %63 = vmatpush.msra.mxu0 %v56
    %64 = vmatpush.msra.mxu0 %v55
    %65 = vmatpush.msra.mxu0 %v54
    %66 = vmatpush.msra.mxu0 %v53
    %67 = vmatpush.msra.mxu0 %v52
    %68 = vmatpush.msra.mxu0 %v51
    %69 = vmatpush.msra.mxu0 %v50
    %70 = vmatpush.msra.mxu0 %v49
    %71 = vmatpush.msra.mxu0 %v48
    %72 = vmatpush.msra.mxu0 %v47
    %73 = vmatpush.msra.mxu0 %v46
    %74 = vmatpush.msra.mxu0 %v45
    %75 = vmatpush.msra.mxu0 %v44
    %76 = vmatpush.msra.mxu0 %v43
    %77 = vmatpush.msra.mxu0 %v42
    %78 = vmatmul.f32.gmra.mxu0 %v40
    %v79 = vpop.f32.mrf.mxu0
    %v80 = vadd.f32 %v60, %v79
    %81 = vmatmul.f32.gmra.mxu0 %v41
    %v82 = vpop.f32.mrf.mxu0
    %v83 = vadd.f32 %v60, %v82
    %84 = vdwg.mxu0
    %v85 = vld [vmem:[%s1] sm:$0xff]
    %v86 = vld [vmem:[%s1 + $0x8] sm:$0xff]
    %v87 = vadd.f32 %v80, %v85
    %v88 = vadd.f32 %v83, %v86
    %v89 = vld [vmem:[%s4] sm:$0x1]
    %v90 = vld [vmem:[%s5] sm:$0x1]
    %91 = vadd.xlane.f32.xlu0 %v87
    %v92 = vpop.xlane.xlu0 %91
    %93 = vadd.xlane.f32.xlu0 %v88
    %v94 = vpop.xlane.xlu0 %93
    %v95 = vmul.f32 %v92, 0.03125
    %v96 = vmul.f32 %v94, 0.03125
    %v97 = vmul.f32 %v87, %v87
    %v98 = vmul.f32 %v88, %v88
    %99 = vadd.xlane.f32.xlu0 %v97
    %v100 = vpop.xlane.xlu0 %99
    %101 = vadd.xlane.f32.xlu0 %v98
    %v102 = vpop.xlane.xlu0 %101
    %v103 = vmul.f32 %v100, 0.03125
    %v104 = vmul.f32 %v102, 0.03125
    %v105 = vmul.f32 %v95, %v95
    %v106 = vmul.f32 %v96, %v96
    %v107 = vsub.f32 %v103, %v105
    %v108 = vsub.f32 %v104, %v106
    %v109 = vmax.f32 %v107, 0.0
    %v110 = vmax.f32 %v108, 0.0
    %v111 = vadd.f32 %v109, 1e-12
    %v112 = vadd.f32 %v110, 1e-12
    %v113 = vrsqrt.pop %v111
    %v114 = vmul.f32 %v113, %v111
    %v115 = vmul.f32 %v114, %v113
    %v116 = vmul.f32 0.5, %v115
    %v117 = vsub.f32 1.5, %v116
    %v118 = vmul.f32 %v113, %v117
    %vm119 = vweird.f32 %v111
    %vm120 = vweird.f32 %v113
    %vm121 = vmor %vm119, %vm120
    %v122 = vsel %vm121, %v113, %v118
    %v123 = vrsqrt.pop %v112
    %v124 = vmul.f32 %v123, %v112
    %v125 = vmul.f32 %v124, %v123
    %v126 = vmul.f32 0.5, %v125
    %v127 = vsub.f32 1.5, %v126
    %v128 = vmul.f32 %v123, %v127
    %vm129 = vweird.f32 %v112
    %vm130 = vweird.f32 %v123
    %vm131 = vmor %vm129, %vm130
    %v132 = vsel %vm131, %v123, %v128
    %v133 = vsub.f32 %v87, %v95
    %v134 = vsub.f32 %v88, %v96
    %v135 = vmul.f32 %v133, %v122
    %v136 = vmul.f32 %v134, %v132
    %v138 = vperm.slane %v89, 0
    %v140 = vmul.f32 %v135, %v138
    %v141 = vmul.f32 %v136, %v138
    %v143 = vperm.slane %v90, 0
    %v145 = vadd.f32 %v140, %v143
    %v146 = vadd.f32 %v141, %v143
    %147 = vst [vmem:[#allocation5] sm:$0xff] %v145
    %148 = vst [vmem:[#allocation5 + $0x8] sm:$0xff] %v146
    // Predicated region
    $region30: #{fn.1} parent=1 // pred_check
      _
    $region31: #{fn.1} parent=1 // pred_check_branch
      %150 = sbr.rel (0) target = $region33
    $region32: #{fn.1} parent=1 // pred_region
      %152 = vsyncadd [#allocation4], 0
      %s153 = sshll.u32 [#allocation5], 4
      %s154 = int_to_ptr.vmem [resolvable:$true] %s153
      %s155 = sshll.u32 %s6, 4
      %s156 = int_to_ptr.hbm [resolvable:$true] %s155
      %161 = dma.vmem_to_hbm [thread:$0]  %s154, 256, %s156, [#allocation4], 128, 128, 8
    $region33: #{fn.1} parent=1 // pred_fallthru
      _
    // Predicated region
    $region34: #{fn.1} parent=1 // pred_check
      _
    $region35: #{fn.1} parent=1 // pred_check_branch
      %163 = sbr.rel (0) target = $region37
    $region36: #{fn.1} parent=1 // pred_region
      %165 = dma.done [#allocation4], 256
    $region37: #{fn.1} parent=1 // pred_fallthru
      _
    %166 = vsyncpa [#allocation3], 1
    %167 = vsyncpa [#allocation4], 1

</llo_original>
